<compile_context>
chip_gen: v7x
topology: tpu7x:2x2x1
jax: 0.10.0
libtpu: 0.0.40
codegen_flags: <defaults>
</compile_context>

<pallas_src>
import functools
import math

import jax
import jax.numpy as jnp
from jax import lax
from jax.experimental import pallas as pl
from jax.experimental.pallas import tpu as pltpu


def _round_up(x, m):
    return (x + m - 1) // m * m


def _pow2_divisor(n):
    return n & -n


def _local_op_kernel(x_ref, w1t_ref, w2t_ref, bias_ref, o_ref, *, seq, gpc):
    # x_ref:    (tb*seq, d)  point rows, channels on the lane axis (input dtype)
    # w1t_ref:  (d,  Cp)     conv1 weight^T with BN1 scale folded, lane-padded
    # w2t_ref:  (Cp, Cp)     conv2 weight^T with BN2 scale folded, padded both ways
    # bias_ref: (2,  Cp)     row 0 = BN1 bias, row 1 = BN2 bias (f32, zero padded)
    # o_ref:    (tb, Cp)     max over seq of relu(bn2(conv2(relu(bn1(conv1(x))))))
    Cp = w2t_ref.shape[1]
    tb = o_ref.shape[0]
    nchunks = tb // gpc
    rows = gpc * seq
    mm_dtype = w1t_ref.dtype

    def chunk(c, carry):
        r0 = pl.multiple_of(c * rows, _pow2_divisor(rows))
        g0 = pl.multiple_of(c * gpc, _pow2_divisor(gpc))

        # Cast to the matmul dtype on-chip (no extra HBM pass in the wrapper).
        xc = x_ref[pl.ds(r0, rows), :].astype(mm_dtype)                 # (rows, d)

        # conv1 (1x1) + BN1 (scale folded into weights) + ReLU
        y1 = jnp.dot(xc, w1t_ref[...], preferred_element_type=jnp.float32)
        y1 = jnp.maximum(y1 + bias_ref[0:1, :], 0.0)                    # (rows, Cp)

        # conv2 (1x1) + BN2 + ReLU
        y2 = jnp.dot(y1.astype(mm_dtype), w2t_ref[...],
                     preferred_element_type=jnp.float32)
        y2 = jnp.maximum(y2 + bias_ref[1:2, :], 0.0)                    # (rows, Cp)

        # adaptive_max_pool1d(., 1): max over this chunk's seq axis, then write
        # gpc lane-dense output rows for these (complete) groups.
        o_ref[pl.ds(g0, gpc), :] = jnp.max(y2.reshape(gpc, seq, Cp), axis=1)
        return carry

    if nchunks == 1:
        chunk(0, 0)
    else:
        lax.fori_loop(0, nchunks, chunk, 0, unroll=min(nchunks, 8))


def local_op_pallas(x, w1, w2, g1, be1, m1, v1, g2, be2, m2, v2,
                    *, eps=1e-5, tb=256, mm_dtype=jnp.bfloat16):
    """x: (b, n, s, d) float32. Returns (b, C, n) float32 (eval-mode BN)."""
    b, n, s, d = x.shape
    C = w1.shape[0]
    B = b * n
    Cp = _round_up(C, 128)        # lane-dense hidden + output channels

    # In-kernel chunk: whole groups, ~128 rows of matmul work per chunk, with
    # the chunk's row-slice start kept sublane (8) aligned.
    gpc = max(1, 128 // s)
    gpc = _round_up(gpc, 8 // math.gcd(s, 8))
    tb_unit = math.lcm(gpc, 8)    # output rows per grid step stay 8-aligned

    # Batch tile (groups per grid step); never larger than the padded batch.
    tb_eff = min(_round_up(max(tb, tb_unit), tb_unit), _round_up(B, tb_unit))
    # v7x has 2 TensorCores: prefer >= 2 parallel grid steps when B allows.
    if pl.cdiv(B, tb_eff) < 2 and _round_up(B, tb_unit) > tb_unit:
        tb_eff = max(tb_unit, _round_up(pl.cdiv(B, 2), tb_unit))
    grid = pl.cdiv(B, tb_eff)

    # (b, n, s, d) -> (B*s, d): pure view; each group's s points are contiguous
    # rows with channels on the lane axis.  No pad / astype pass over x in HBM:
    # the ragged tail is a partial last block, the bf16 cast happens in-kernel.
    x2d = x.reshape(B * s, d)

    # Fold eval-mode BatchNorm into per-channel scale (into weights) + bias.
    scale1 = g1 / jnp.sqrt(v1 + eps)
    bias1 = be1 - m1 * scale1
    scale2 = g2 / jnp.sqrt(v2 + eps)
    bias2 = be2 - m2 * scale2

    pad_c = Cp - C
    w1t = jnp.pad(jnp.transpose(w1) * scale1[None, :], ((0, 0), (0, pad_c)))
    w2t = jnp.pad(jnp.transpose(w2) * scale2[None, :], ((0, pad_c), (0, pad_c)))
    biases = jnp.stack([jnp.pad(bias1, (0, pad_c)),
                        jnp.pad(bias2, (0, pad_c))]).astype(jnp.float32)
    w1t = w1t.astype(mm_dtype)
    w2t = w2t.astype(mm_dtype)

    kernel = functools.partial(_local_op_kernel, seq=s, gpc=gpc)

    x_item = jnp.dtype(x.dtype).itemsize
    w_item = jnp.dtype(mm_dtype).itemsize
    cost = pl.CostEstimate(
        flops=2 * B * s * (d * Cp + Cp * Cp),
        transcendentals=0,
        bytes_accessed=B * s * d * x_item + B * Cp * 4
                       + (d * Cp + Cp * Cp + 2 * Cp) * w_item)

    # VMEM budget: double-buffered x/out blocks + resident weights + headroom
    # for y1/y2 spills.  Clamped to [32 MiB, 64 MiB] so it is safe on v7x.
    blk_bytes = (2 * tb_eff * s * d * x_item
                 + 2 * tb_eff * Cp * 4
                 + 2 * (d * Cp + Cp * Cp + 2 * Cp) * 4
                 + 8 * gpc * s * Cp * 4)
    vmem_limit = int(min(64 * 2 ** 20, max(32 * 2 ** 20, blk_bytes)))

    out = pl.pallas_call(
        kernel,
        out_shape=jax.ShapeDtypeStruct((B, Cp), jnp.float32),
        grid_spec=pltpu.PrefetchScalarGridSpec(
            num_scalar_prefetch=0,
            grid=(grid,),
            in_specs=[
                pl.BlockSpec((tb_eff * s, d), lambda i: (i, 0)),   # x rows
                pl.BlockSpec((d, Cp), lambda i: (0, 0)),           # folded w1^T
                pl.BlockSpec((Cp, Cp), lambda i: (0, 0)),          # folded w2^T
                pl.BlockSpec((2, Cp), lambda i: (0, 0)),           # stacked biases
            ],
            out_specs=pl.BlockSpec((tb_eff, Cp), lambda i: (i, 0)),
        ),
        compiler_params=pltpu.CompilerParams(
            dimension_semantics=("parallel",),
            vmem_limit_bytes=vmem_limit),
        cost_estimate=cost,
    )(x2d, w1t, w2t, biases)

    # Drop channel lane padding, (B, C) -> (b, n, C) -> (b, C, n)
    out = out[:, :C]
    return jnp.transpose(out.reshape(b, n, C), (0, 2, 1))


def local_op_reference(x, w1, w2, g1, be1, m1, v1, g2, be2, m2, v2, eps=1e-5):
    """Pure-JAX reference mirroring the PyTorch forward (BN in eval mode)."""
    b, n, s, d = x.shape
    C = w1.shape[0]
    xr = jnp.transpose(x, (0, 1, 3, 2)).reshape(b * n, d, s)          # (B, d, s)
    y1 = jnp.einsum('cd,bds->bcs', w1, xr)
    y1 = jax.nn.relu((y1 - m1[None, :, None]) / jnp.sqrt(v1 + eps)[None, :, None]
                     * g1[None, :, None] + be1[None, :, None])
    y2 = jnp.einsum('ce,bes->bcs', w2, y1)
    y2 = jax.nn.relu((y2 - m2[None, :, None]) / jnp.sqrt(v2 + eps)[None, :, None]
                     * g2[None, :, None] + be2[None, :, None])
    x3 = jnp.max(y2, axis=2)                                          # (B, C)
    return jnp.transpose(x3.reshape(b, n, C), (0, 2, 1))


if __name__ == "__main__":
    # Small shapes consistent with the forward: x is (b, n, s, d)
    b, n, s, d = 2, 8, 16, 32
    in_channels, out_channels = d, 64

    key = jax.random.PRNGKey(0)
    kx, kw1, kw2, kg1, kb1, km1, kv1, kg2, kb2, km2, kv2 = jax.random.split(key, 11)

    x = jax.random.normal(kx, (b, n, s, d), dtype=jnp.float32)

    # Conv1d kernel_size=1, bias=False -> weight (C_out, C_in)
    w1 = 0.1 * jax.random.normal(kw1, (out_channels, in_channels), jnp.float32)
    w2 = 0.1 * jax.random.normal(kw2, (out_channels, out_channels), jnp.float32)

    # Deterministic synthetic BatchNorm parameters / running stats (eval mode).
    g1 = 1.0 + 0.1 * jax.random.normal(kg1, (out_channels,), jnp.float32)
    be1 = 0.1 * jax.random.normal(kb1, (out_channels,), jnp.float32)
    m1 = 0.05 * jax.random.normal(km1, (out_channels,), jnp.float32)
    v1 = 1.0 + 0.1 * jax.random.uniform(kv1, (out_channels,), jnp.float32)

    g2 = 1.0 + 0.1 * jax.random.normal(kg2, (out_channels,), jnp.float32)
    be2 = 0.1 * jax.random.normal(kb2, (out_channels,), jnp.float32)
    m2 = 0.05 * jax.random.normal(km2, (out_channels,), jnp.float32)
    v2 = 1.0 + 0.1 * jax.random.uniform(kv2, (out_channels,), jnp.float32)

    ref = local_op_reference(x, w1, w2, g1, be1, m1, v1, g2, be2, m2, v2)

    # Default path: bf16 MXU operands, f32 accumulation -> loose tolerance.
    out_bf16 = jax.block_until_ready(
        local_op_pallas(x, w1, w2, g1, be1, m1, v1, g2, be2, m2, v2))
    assert out_bf16.shape == (b, out_channels, n), out_bf16.shape
    assert jnp.allclose(out_bf16, ref, atol=3e-2, rtol=3e-2), (
        float(jnp.max(jnp.abs(out_bf16 - ref))))

    # f32 operand path: exact semantics, tight tolerance.
    out_f32 = jax.block_until_ready(
        local_op_pallas(x, w1, w2, g1, be1, m1, v1, g2, be2, m2, v2,
                        mm_dtype=jnp.float32))
    assert jnp.allclose(out_f32, ref, atol=1e-4, rtol=1e-4), (
        float(jnp.max(jnp.abs(out_f32 - ref))))

    # Ragged batch (B = b*n not a multiple of the tile) exercises the partial
    # last block path (no wrapper-side padding of x).
    b2, n2 = 1, 3
    x_small = jax.random.normal(jax.random.PRNGKey(1), (b2, n2, s, d), jnp.float32)
    ref2 = local_op_reference(x_small, w1, w2, g1, be1, m1, v1, g2, be2, m2, v2)
    out2 = jax.block_until_ready(
        local_op_pallas(x_small, w1, w2, g1, be1, m1, v1, g2, be2, m2, v2))
    assert out2.shape == (b2, out_channels, n2), out2.shape
    assert jnp.allclose(out2, ref2, atol=3e-2, rtol=3e-2), (
        float(jnp.max(jnp.abs(out2 - ref2))))
    out2_f32 = jax.block_until_ready(
        local_op_pallas(x_small, w1, w2, g1, be1, m1, v1, g2, be2, m2, v2,
                        mm_dtype=jnp.float32))
    assert jnp.allclose(out2_f32, ref2, atol=1e-4, rtol=1e-4), (
        float(jnp.max(jnp.abs(out2_f32 - ref2))))

    print("KERNEL_OK")
</pallas_src>

<mosaic_0001>
module attributes {stable_mosaic.version = 11 : i64} {
  func.func @_local_op_kernel(%arg0: i32, %arg1: memref<128x32xf32, #tpu.memory_space<vmem>>, %arg2: memref<32x128xbf16, #tpu.memory_space<vmem>>, %arg3: memref<128x128xbf16, #tpu.memory_space<vmem>>, %arg4: memref<2x128xf32, #tpu.memory_space<vmem>>, %arg5: memref<8x128xf32, #tpu.memory_space<vmem>>) attributes {dimension_semantics = [#tpu.dimension_semantics<parallel>], iteration_bounds = array<i64: 2>, scalar_prefetch = 0 : i64, scratch_operands = 0 : i64, tpu.core_type = #tpu.core_type<tc>, window_params = [{transform_indices = @transform_0, window_bounds = array<i64: 128, 32>}, {pipeline_mode = #tpu.pipeline_mode<synchronous>, transform_indices = @transform_1, window_bounds = array<i64: 32, 128>}, {pipeline_mode = #tpu.pipeline_mode<synchronous>, transform_indices = @transform_2, window_bounds = array<i64: 128, 128>}, {pipeline_mode = #tpu.pipeline_mode<synchronous>, transform_indices = @transform_3, window_bounds = array<i64: 2, 128>}, {transform_indices = @transform_4, window_bounds = array<i64: 8, 128>}]} {
    %c0_i32 = arith.constant 0 : i32
    %0 = tpu.assume_multiple %c0_i32, 128 : i32
    %c0_i32_0 = arith.constant 0 : i32
    %1 = tpu.assume_multiple %c0_i32_0, 8 : i32
    %2 = arith.index_cast %0 : i32 to index
    %c0 = arith.constant 0 : index
    %3 = vector.load %arg1[%2, %c0] : memref<128x32xf32, #tpu.memory_space<vmem>>, vector<128x32xf32>
    %4 = arith.truncf %3 : vector<128x32xf32> to vector<128x32xbf16>
    %c0_1 = arith.constant 0 : index
    %c0_2 = arith.constant 0 : index
    %5 = vector.load %arg2[%c0_1, %c0_2] : memref<32x128xbf16, #tpu.memory_space<vmem>>, vector<32x128xbf16>
    %cst = arith.constant dense<0.000000e+00> : vector<128x128xf32>
    %6 = tpu.matmul %4, %5, %cst {dimension_numbers = #tpu.dot_dimension_numbers<[1], [0], [0], [1], [0, 0, 1, 1], [], []>} : vector<128x32xbf16>, vector<32x128xbf16>, vector<128x128xf32> -> vector<128x128xf32>
    %c0_3 = arith.constant 0 : index
    %c0_4 = arith.constant 0 : index
    %7 = vector.load %arg4[%c0_3, %c0_4] : memref<2x128xf32, #tpu.memory_space<vmem>>, vector<1x128xf32>
    %8 = vector.broadcast %7 : vector<1x128xf32> to vector<128x128xf32>
    %9 = arith.addf %6, %8 : vector<128x128xf32>
    %cst_5 = arith.constant 0.000000e+00 : f32
    %10 = vector.broadcast %cst_5 : f32 to vector<128x128xf32>
    %11 = arith.maximumf %9, %10 : vector<128x128xf32>
    %12 = arith.truncf %11 : vector<128x128xf32> to vector<128x128xbf16>
    %c0_6 = arith.constant 0 : index
    %c0_7 = arith.constant 0 : index
    %13 = vector.load %arg3[%c0_6, %c0_7] : memref<128x128xbf16, #tpu.memory_space<vmem>>, vector<128x128xbf16>
    %cst_8 = arith.constant dense<0.000000e+00> : vector<128x128xf32>
    %14 = tpu.matmul %12, %13, %cst_8 {dimension_numbers = #tpu.dot_dimension_numbers<[1], [0], [0], [1], [0, 0, 1, 1], [], []>} : vector<128x128xbf16>, vector<128x128xbf16>, vector<128x128xf32> -> vector<128x128xf32>
    %c1 = arith.constant 1 : index
    %c0_9 = arith.constant 0 : index
    %15 = vector.load %arg4[%c1, %c0_9] : memref<2x128xf32, #tpu.memory_space<vmem>>, vector<1x128xf32>
    %16 = vector.broadcast %15 : vector<1x128xf32> to vector<128x128xf32>
    %17 = arith.addf %14, %16 : vector<128x128xf32>
    %cst_10 = arith.constant 0.000000e+00 : f32
    %18 = vector.broadcast %cst_10 : f32 to vector<128x128xf32>
    %19 = arith.maximumf %17, %18 : vector<128x128xf32>
    %20 = vector.shape_cast %19 : vector<128x128xf32> to vector<8x16x128xf32>
    %cst_11 = arith.constant dense<0xFF800000> : vector<8x128xf32>
    %21 = vector.multi_reduction <maximumf>, %20, %cst_11 [1] : vector<8x16x128xf32> to vector<8x128xf32>
    %22 = arith.index_cast %1 : i32 to index
    %c0_12 = arith.constant 0 : index
    %23 = vector.load %arg5[%22, %c0_12] : memref<8x128xf32, #tpu.memory_space<vmem>>, vector<8x128xf32>
    tpu.vector_store %arg5[%22, %c0_12], %21 {strides = array<i32>} : memref<8x128xf32, #tpu.memory_space<vmem>>, vector<8x128xf32>,
    return
  }
  func.func @transform_0(%arg0: i32) -> (i32, i32) {
    %c0_i32 = arith.constant 0 : i32
    %c0_i32_0 = arith.constant 0 : i32
    return %arg0, %c0_i32 : i32, i32
  }
  func.func @transform_1(%arg0: i32) -> (i32, i32) {
    %c0_i32 = arith.constant 0 : i32
    %c0_i32_0 = arith.constant 0 : i32
    %c0_i32_1 = arith.constant 0 : i32
    return %c0_i32, %c0_i32_0 : i32, i32
  }
  func.func @transform_2(%arg0: i32) -> (i32, i32) {
    %c0_i32 = arith.constant 0 : i32
    %c0_i32_0 = arith.constant 0 : i32
    %c0_i32_1 = arith.constant 0 : i32
    return %c0_i32, %c0_i32_0 : i32, i32
  }
  func.func @transform_3(%arg0: i32) -> (i32, i32) {
    %c0_i32 = arith.constant 0 : i32
    %c0_i32_0 = arith.constant 0 : i32
    %c0_i32_1 = arith.constant 0 : i32
    return %c0_i32, %c0_i32_0 : i32, i32
  }
  func.func @transform_4(%arg0: i32) -> (i32, i32) {
    %c0_i32 = arith.constant 0 : i32
    %c0_i32_0 = arith.constant 0 : i32
    return %arg0, %c0_i32 : i32, i32
  }
}

</mosaic_0001>

<llo_original>
// kernel: tpu_custom_call.1
$region0: #{tpu_custom_call.1}
  #allocation0 [shape = 'u32[]', space=smem, size = 0x4, offset = 0x4, fixed_abs, tag = 'smem constant byte address 0x4 - core index']
  #allocation1 [shape = 'u32[144,128]{1,0:T(1,128)}', space=vmem, size = 0x12000, scoped, tag = 'internal scratch']
  %s0 = inlined_call_operand.vmem [shape: f32[256,32], index: 0, kind: input, shape index: {}]
  %s1 = inlined_call_operand.vmem [shape: bf16[32,128], index: 1, kind: input, shape index: {}]
  %s2 = inlined_call_operand.vmem [shape: bf16[128,128], index: 2, kind: input, shape index: {}]
  %s3 = inlined_call_operand.vmem [shape: f32[2,128], index: 3, kind: input, shape index: {}]
  %s4 = inlined_call_operand.hbm [shape: f32[16,128], index: 4, kind: output, shape index: {}]
  %s5 = sld [smem:[#allocation0]]
  $region49: #{tpu_custom_call.1} parent=0
    _
  %s7 = ssub.s32 1, %s5
  %s8 = scalar_select 0, %s7, %s5
  $region1: #{tpu_custom_call.1} parent=0
    #allocation2 [shape = 'u8[8192]{0}', space=vmem, size = 0x2000, scoped, tag = 'output window, operand 0']
    #allocation3 [shape = 's32[2]{0}', space=sflag, size = 0x8, scoped, tag = 'scoped memory for tpu_custom_call.1']
    %9 = vsyncpa [#allocation3], 0
    %s10 = scalar_lea.sflag [#allocation3], 1
    %11 = vsyncpa %s10, 0
    loop: start=0, step=1, limit=4
    $region2: #{tpu_custom_call.1} parent=1 // loop_pre_header
      _
    $region3: #{tpu_custom_call.1} parent=1 // loop_header
      %s13 = sphi 0, %s17
      %p14 = scmp.ge.s32.totalorder %s13, 4
      %s23 = sphi 0, %s25
      %s26 = sphi 0, %s23
      %s27 = sphi 0, %s26
      %s43 = sphi 0, %s27
      %s47 = sphi 0, %s47
      %s49 = sphi 0, %s47
      %s50 = sphi 0, %s49
      %s64 = sphi 0, %s50
      %s68 = sphi 0, %s68
      %s70 = sphi 0, %s68
      %s71 = sphi 0, %s70
      %s85 = sphi 0, %s71
      %s89 = sphi 0, %s89
      %s91 = sphi 0, %s89
      %s92 = sphi 0, %s91
      %s106 = sphi 0, %s92
      %s112 = sphi 0, %s114
      %s115 = sphi 0, %s112
      %s116 = sphi 0, %s115
      %s132 = sphi 0, %s116
    $region4: #{tpu_custom_call.1} parent=1 // loop_header_branch
      %16 = sbr.rel (%p14) target = $region8
    $region5: #{tpu_custom_call.1} parent=1 // loop_body
      %s18 = ssub.s32 %s13, 1
      %s19 = ssub.s32 %s13, 2
      %s20 = sadd.s32 %s13, 1
      %s21 = ssub.s32 %s13, %s20
      %p22 = scmp.eq.s32.totalorder %s21, 0
      %s24 = sadd.s32 %s23, 1
      %s25 = scalar_select %p22, %s23, %s24
      %p28 = pneg %p22
      %p29 = scmp.eq.s32.totalorder %s13, 1
      %p30 = por %p28, %p29
      %p31 = scmp.ne.s32.totalorder %s23, %s26
      %p32 = scmp.eq.s32.totalorder %s13, 0
      %p33 = por %p31, %p32
      %p34 = scmp.ne.s32.totalorder %s23, %s26
      %p35 = scmp.eq.s32.totalorder %s18, 1
      %p36 = por %p34, %p35
      %p37 = scmp.ne.s32.totalorder %s26, %s27
      %p38 = scmp.eq.s32.totalorder %s18, 0
      %p39 = por %p37, %p38
      %p40 = scmp.ne.s32.totalorder %s26, %s27
      %p41 = scmp.eq.s32.totalorder %s19, 1
      %p42 = por %p40, %p41
      %p44 = scmp.ne.s32.totalorder %s27, %s43
      %p45 = scmp.eq.s32.totalorder %s19, 0
      %p46 = por %p44, %p45
      %s48 = sadd.s32 %s47, 1
      %p51 = scmp.eq.s32.totalorder %s13, 1
      %p52 = scmp.ne.s32.totalorder %s47, %s49
      %p53 = scmp.eq.s32.totalorder %s13, 0
      %p54 = por %p52, %p53
      %p55 = scmp.ne.s32.totalorder %s47, %s49
      %p56 = scmp.eq.s32.totalorder %s18, 1
      %p57 = por %p55, %p56
      %p58 = scmp.ne.s32.totalorder %s49, %s50
      %p59 = scmp.eq.s32.totalorder %s18, 0
      %p60 = por %p58, %p59
      %p61 = scmp.ne.s32.totalorder %s49, %s50
      %p62 = scmp.eq.s32.totalorder %s19, 1
      %p63 = por %p61, %p62
      %p65 = scmp.ne.s32.totalorder %s50, %s64
      %p66 = scmp.eq.s32.totalorder %s19, 0
      %p67 = por %p65, %p66
      %s69 = sadd.s32 %s68, 1
      %p72 = scmp.eq.s32.totalorder %s13, 1
      %p73 = scmp.ne.s32.totalorder %s68, %s70
      %p74 = scmp.eq.s32.totalorder %s13, 0
      %p75 = por %p73, %p74
      %p76 = scmp.ne.s32.totalorder %s68, %s70
      %p77 = scmp.eq.s32.totalorder %s18, 1
      %p78 = por %p76, %p77
      %p79 = scmp.ne.s32.totalorder %s70, %s71
      %p80 = scmp.eq.s32.totalorder %s18, 0
      %p81 = por %p79, %p80
      %p82 = scmp.ne.s32.totalorder %s70, %s71
      %p83 = scmp.eq.s32.totalorder %s19, 1
      %p84 = por %p82, %p83
      %p86 = scmp.ne.s32.totalorder %s71, %s85
      %p87 = scmp.eq.s32.totalorder %s19, 0
      %p88 = por %p86, %p87
      %s90 = sadd.s32 %s89, 1
      %p93 = scmp.eq.s32.totalorder %s13, 1
      %p94 = scmp.ne.s32.totalorder %s89, %s91
      %p95 = scmp.eq.s32.totalorder %s13, 0
      %p96 = por %p94, %p95
      %p97 = scmp.ne.s32.totalorder %s89, %s91
      %p98 = scmp.eq.s32.totalorder %s18, 1
      %p99 = por %p97, %p98
      %p100 = scmp.ne.s32.totalorder %s91, %s92
      %p101 = scmp.eq.s32.totalorder %s18, 0
      %p102 = por %p100, %p101
      %p103 = scmp.ne.s32.totalorder %s91, %s92
      %p104 = scmp.eq.s32.totalorder %s19, 1
      %p105 = por %p103, %p104
      %p107 = scmp.ne.s32.totalorder %s92, %s106
      %p108 = scmp.eq.s32.totalorder %s19, 0
      %p109 = por %p107, %p108
      %s110 = ssub.s32 %s13, %s20
      %p111 = scmp.eq.s32.totalorder %s110, 0
      %s113 = sadd.s32 %s112, 1
      %s114 = scalar_select %p111, %s112, %s113
      %p117 = pneg %p111
      %p118 = scmp.eq.s32.totalorder %s13, 1
      %p119 = por %p117, %p118
      %p120 = scmp.ne.s32.totalorder %s112, %s115
      %p121 = scmp.eq.s32.totalorder %s13, 0
      %p122 = por %p120, %p121
      %p123 = scmp.ne.s32.totalorder %s112, %s115
      %p124 = scmp.eq.s32.totalorder %s18, 1
      %p125 = por %p123, %p124
      %p126 = scmp.ne.s32.totalorder %s115, %s116
      %p127 = scmp.eq.s32.totalorder %s18, 0
      %p128 = por %p126, %p127
      %p129 = scmp.ne.s32.totalorder %s115, %s116
      %p130 = scmp.eq.s32.totalorder %s19, 1
      %p131 = por %p129, %p130
      %p133 = scmp.ne.s32.totalorder %s116, %s132
      %p134 = scmp.eq.s32.totalorder %s19, 0
      %p135 = por %p133, %p134
      %p136 = scmp.le.s32.totalorder 1, %s13
      %p137 = scmp.lt.s32.totalorder %s13, 3
      %p138 = pnand %p136, %p137
      %p139 = pneg %p138
      // Predicated region
      $region9: #{tpu_custom_call.1} parent=5 // pred_check
        _
      $region10: #{tpu_custom_call.1} parent=5 // pred_check_branch
        %141 = sbr.rel (%p138) target = $region12
      $region11: #{tpu_custom_call.1} parent=5 // pred_region
        %s142 = ssub.s32 %s13, 1
        // Predicated region
        $region13: #{tpu_custom_call.1} parent=11 // pred_check
          %p143 = pneg %p60
        $region14: #{tpu_custom_call.1} parent=11 // pred_check_branch
          %145 = sbr.rel (%p143) target = $region16
        $region15: #{tpu_custom_call.1} parent=11 // pred_region
          _
        $region16: #{tpu_custom_call.1} parent=11 // pred_fallthru
          _
        // Predicated region
        $region17: #{tpu_custom_call.1} parent=11 // pred_check
          %p146 = pneg %p81
        $region18: #{tpu_custom_call.1} parent=11 // pred_check_branch
          %148 = sbr.rel (%p146) target = $region20
        $region19: #{tpu_custom_call.1} parent=11 // pred_region
          _
        $region20: #{tpu_custom_call.1} parent=11 // pred_fallthru
          _
        // Predicated region
        $region21: #{tpu_custom_call.1} parent=11 // pred_check
          %p149 = pneg %p102
        $region22: #{tpu_custom_call.1} parent=11 // pred_check_branch
          %151 = sbr.rel (%p149) target = $region24
        $region23: #{tpu_custom_call.1} parent=11 // pred_region
          _
        $region24: #{tpu_custom_call.1} parent=11 // pred_fallthru
          _
      $region12: #{tpu_custom_call.1} parent=5 // pred_fallthru
        _
      %p152 = scmp.lt.s32.totalorder %s13, 2
      // Predicated region
      $region25: #{tpu_custom_call.1} parent=5 // pred_check
        %p153 = pneg %p152
      $region26: #{tpu_custom_call.1} parent=5 // pred_check_branch
        %155 = sbr.rel (%p153) target = $region28
      $region27: #{tpu_custom_call.1} parent=5 // pred_region
        // Predicated region
        $region29: #{tpu_custom_call.1} parent=27 // pred_check
          %p156 = pneg %p33
        $region30: #{tpu_custom_call.1} parent=27 // pred_check_branch
          %158 = sbr.rel (%p156) target = $region32
        $region31: #{tpu_custom_call.1} parent=27 // pred_region
          %s159 = smul.u32 16, %s13
          %p160 = scmp.lt.s32.totalorder %s159, 31
          %s161 = scalar_select %p160, %s159, 31
          %s162 = smul.addr %s161, 8
          %s163 = scalar_lea.vmem %s0, %s162
          %s164 = smul.u32 16, %s13
        $region32: #{tpu_custom_call.1} parent=27 // pred_fallthru
          _
      $region28: #{tpu_custom_call.1} parent=5 // pred_fallthru
        _
      %p165 = scmp.le.s32.totalorder 1, %s13
      %p166 = scmp.lt.s32.totalorder %s13, 3
      %p167 = pnand %p165, %p166
      %p168 = pneg %p167
      // Predicated region
      $region33: #{tpu_custom_call.1} parent=5 // pred_check
        _
      $region34: #{tpu_custom_call.1} parent=5 // pred_check_branch
        %170 = sbr.rel (%p167) target = $region36
      $region35: #{tpu_custom_call.1} parent=5 // pred_region
        %s171 = ssub.s32 %s13, 1
        %s172 = smul.u32 16, %s18
        %p173 = scmp.lt.s32.totalorder %s172, 31
        %s174 = scalar_select %p173, %s172, 31
        %s175 = smul.addr %s174, 8
        %s176 = scalar_lea.vmem %s0, %s175
        %p177 = pneg %p39
        %p178 = pneg %p36
        %p179 = pneg %p60
        %p180 = pneg %p57
        %p181 = pneg %p81
        %p182 = pneg %p78
        %p183 = pneg %p102
        %p184 = pneg %p99
        %p185 = pneg %p128
        %p186 = pneg %p125
        %s187 = sand.u32 %s115, 1
        %s188 = scalar_lea.sflag [#allocation3], %s187
        %s189 = sand.u32 %s115, 1
        %s190 = smul.addr %s189, 8
        %s191 = scalar_lea.vmem [#allocation2], %s190
        %s192 = smul.u32 16, %s18
        %p193 = scmp.lt.s32.totalorder %s192, 31
        %s194 = scalar_select %p193, %s192, 31
        %s195 = smul.addr %s194, 8
        %s196 = scalar_lea.vmem %s0, %s195
        %s197 = smul.u32 16, %s18
        %v199 = vld [vmem:[%s196] sm:$0xff]
        %v200 = vld [vmem:[%s196 + $0x8] sm:$0xff]
        %v201 = vld [vmem:[%s196 + $0x10] sm:$0xff]
        %v202 = vld [vmem:[%s196 + $0x18] sm:$0xff]
        %v203 = vld [vmem:[%s196 + $0x20] sm:$0xff]
        %v204 = vld [vmem:[%s196 + $0x28] sm:$0xff]
        %v205 = vld [vmem:[%s196 + $0x30] sm:$0xff]
        %v206 = vld [vmem:[%s196 + $0x38] sm:$0xff]
        %v207 = vld [vmem:[%s196 + $0x40] sm:$0xff]
        %v208 = vld [vmem:[%s196 + $0x48] sm:$0xff]
        %v209 = vld [vmem:[%s196 + $0x50] sm:$0xff]
        %v210 = vld [vmem:[%s196 + $0x58] sm:$0xff]
        %v211 = vld [vmem:[%s196 + $0x60] sm:$0xff]
        %v212 = vld [vmem:[%s196 + $0x68] sm:$0xff]
        %v213 = vld [vmem:[%s196 + $0x70] sm:$0xff]
        %v214 = vld [vmem:[%s196 + $0x78] sm:$0xff]
        %v215 = vpack.c.bf16 %v200, %v199
        %v216 = vpack.c.bf16 %v202, %v201
        %v217 = vpack.c.bf16 %v204, %v203
        %v218 = vpack.c.bf16 %v206, %v205
        %v219 = vpack.c.bf16 %v208, %v207
        %v220 = vpack.c.bf16 %v210, %v209
        %v221 = vpack.c.bf16 %v212, %v211
        %v222 = vpack.c.bf16 %v214, %v213
        %v223 = vld [vmem:[%s1] sm:$0xf]
        %v224 = vld [vmem:[%s1 + $0x4] sm:$0xf]
        %v225 = vld [vmem:[%s1 + $0x8] sm:$0xf]
        %v226 = vld [vmem:[%s1 + $0xc] sm:$0xf]
        %v227 = vld [vmem:[%s3] sm:$0x1]
        %v228 = vlaneseq
        %v229 = vshrl.u32 %v228, 7
        %v230 = vsub.s32 0, %v229
        %v231 = vrot.slane %v227, %v230
        %v236 = vunpack.c.l.b16 %v223
        %v237 = vunpack.c.l.b16 %v224
        %v238 = vunpack.c.l.b16 %v225
        %v239 = vunpack.c.l.b16 %v226
        %v240 = vpack.c.b16 %v237, %v236
        %v241 = vpack.c.b16 %v239, %v238
        %vm244 = vcmask 261120
        %v246 = vsel %vm244, %v215, 0
        %v249 = vsel %vm244, %v216, 0
        %v252 = vsel %vm244, %v217, 0
        %v255 = vsel %vm244, %v218, 0
        %v258 = vsel %vm244, %v219, 0
        %v261 = vsel %vm244, %v220, 0
        %v264 = vsel %vm244, %v221, 0
        %v267 = vsel %vm244, %v222, 0
        %269 = vmatprep.subr.bf16.mxu0 0
        %270 = vmatpush1.bf16.msra.mxu0 %v240
        %271 = vmatprep.subr.bf16.mxu0 0
        %272 = vmatpush1.bf16.msra.mxu0 %v241
        %273 = vmatprep.subr.bf16.mxu0 0
        %274 = vmatpush1.bf16.msra.mxu0 0
        %275 = vmatprep.subr.bf16.mxu0 0
        %276 = vmatpush1.bf16.msra.mxu0 0
        %277 = vmatprep.subr.bf16.mxu0 0
        %278 = vmatpush1.bf16.msra.mxu0 0
        %279 = vmatprep.subr.bf16.mxu0 0
        %280 = vmatpush1.bf16.msra.mxu0 0
        %281 = vmatprep.subr.bf16.mxu0 0
        %282 = vmatpush1.bf16.msra.mxu0 0
        %283 = vmatprep.subr.bf16.mxu0 0
        %284 = vmatpush1.bf16.msra.mxu0 0
        %285 = vmatprep.subr.bf16.mxu0 0
        %286 = vmatpush1.bf16.msra.mxu0 0
        %287 = vmatprep.subr.bf16.mxu0 0
        %288 = vmatpush1.bf16.msra.mxu0 0
        %289 = vmatprep.subr.bf16.mxu0 0
        %290 = vmatpush1.bf16.msra.mxu0 0
        %291 = vmatprep.subr.bf16.mxu0 0
        %292 = vmatpush1.bf16.msra.mxu0 0
        %293 = vmatprep.subr.bf16.mxu0 0
        %294 = vmatpush1.bf16.msra.mxu0 0
        %295 = vmatprep.subr.bf16.mxu0 0
        %296 = vmatpush1.bf16.msra.mxu0 0
        %297 = vmatprep.subr.bf16.mxu0 0
        %298 = vmatpush1.bf16.msra.mxu0 0
        %299 = vmatprep.subr.bf16.mxu0 0
        %300 = vmatpush1.bf16.msra.mxu0 0
        %301 = vmatprep.mubr.bf16.mxu0 0
        %302 = vmatmul.mubr.bf16.gmra.mrb[0].mxu0 %v246
        %v303 = vpop.f32.mrb[0].mxu0
        %v304 = vadd.f32 %v231, %v303
        %v305 = vpop.f32.mrb[0].mxu0
        %v306 = vpop.f32.mrb[0].mxu0
        %v307 = vadd.f32 %v231, %v306
        %v308 = vpop.f32.mrb[0].mxu0
        %309 = vmatprep.mubr.bf16.mxu0 0
        %310 = vmatmul.mubr.bf16.gmra.mrb[0].mxu0 %v249
        %v311 = vpop.f32.mrb[0].mxu0
        %v312 = vadd.f32 %v231, %v311
        %v313 = vpop.f32.mrb[0].mxu0
        %v314 = vpop.f32.mrb[0].mxu0
        %v315 = vadd.f32 %v231, %v314
        %v316 = vpop.f32.mrb[0].mxu0
        %317 = vmatprep.mubr.bf16.mxu0 0
        %318 = vmatmul.mubr.bf16.gmra.mrb[0].mxu0 %v252
        %v319 = vpop.f32.mrb[0].mxu0
        %v320 = vadd.f32 %v231, %v319
        %v321 = vpop.f32.mrb[0].mxu0
        %v322 = vpop.f32.mrb[0].mxu0
        %v323 = vadd.f32 %v231, %v322
        %v324 = vpop.f32.mrb[0].mxu0
        %325 = vmatprep.mubr.bf16.mxu0 0
        %326 = vmatmul.mubr.bf16.gmra.mrb[0].mxu0 %v255
        %v327 = vpop.f32.mrb[0].mxu0
        %v328 = vadd.f32 %v231, %v327
        %v329 = vpop.f32.mrb[0].mxu0
        %v330 = vpop.f32.mrb[0].mxu0
        %v331 = vadd.f32 %v231, %v330
        %v332 = vpop.f32.mrb[0].mxu0
        %333 = vmatprep.mubr.bf16.mxu0 0
        %334 = vmatmul.mubr.bf16.gmra.mrb[0].mxu0 %v258
        %v335 = vpop.f32.mrb[0].mxu0
        %v336 = vadd.f32 %v231, %v335
        %v337 = vpop.f32.mrb[0].mxu0
        %v338 = vpop.f32.mrb[0].mxu0
        %v339 = vadd.f32 %v231, %v338
        %v340 = vpop.f32.mrb[0].mxu0
        %341 = vmatprep.mubr.bf16.mxu0 0
        %342 = vmatmul.mubr.bf16.gmra.mrb[0].mxu0 %v261
        %v343 = vpop.f32.mrb[0].mxu0
        %v344 = vadd.f32 %v231, %v343
        %v345 = vpop.f32.mrb[0].mxu0
        %v346 = vpop.f32.mrb[0].mxu0
        %v347 = vadd.f32 %v231, %v346
        %v348 = vpop.f32.mrb[0].mxu0
        %349 = vmatprep.mubr.bf16.mxu0 0
        %350 = vmatmul.mubr.bf16.gmra.mrb[0].mxu0 %v264
        %v351 = vpop.f32.mrb[0].mxu0
        %v352 = vadd.f32 %v231, %v351
        %v353 = vpop.f32.mrb[0].mxu0
        %v354 = vpop.f32.mrb[0].mxu0
        %v355 = vadd.f32 %v231, %v354
        %v356 = vpop.f32.mrb[0].mxu0
        %357 = vmatprep.mubr.bf16.mxu0 0
        %358 = vmatmul.mubr.bf16.gmra.mrb[0].mxu0 %v267
        %v359 = vpop.f32.mrb[0].mxu0
        %v360 = vadd.f32 %v231, %v359
        %v361 = vpop.f32.mrb[0].mxu0
        %v362 = vpop.f32.mrb[0].mxu0
        %v363 = vadd.f32 %v231, %v362
        %v364 = vpop.f32.mrb[0].mxu0
        %365 = vdwg.mxu0
        %v366 = vmax.f32 %v304, 0.0
        %v367 = vmax.f32 %v307, 0.0
        %v368 = vmax.f32 %v312, 0.0
        %v369 = vmax.f32 %v315, 0.0
        %v370 = vmax.f32 %v320, 0.0
        %v371 = vmax.f32 %v323, 0.0
        %v372 = vmax.f32 %v328, 0.0
        %v373 = vmax.f32 %v331, 0.0
        %v374 = vmax.f32 %v336, 0.0
        %v375 = vmax.f32 %v339, 0.0
        %v376 = vmax.f32 %v344, 0.0
        %v377 = vmax.f32 %v347, 0.0
        %v378 = vmax.f32 %v352, 0.0
        %v379 = vmax.f32 %v355, 0.0
        %v380 = vmax.f32 %v360, 0.0
        %v381 = vmax.f32 %v363, 0.0
        %v382 = vpack.c.bf16 %v367, %v366
        %v383 = vpack.c.bf16 %v369, %v368
        %v384 = vpack.c.bf16 %v371, %v370
        %v385 = vpack.c.bf16 %v373, %v372
        %v386 = vpack.c.bf16 %v375, %v374
        %v387 = vpack.c.bf16 %v377, %v376
        %v388 = vpack.c.bf16 %v379, %v378
        %v389 = vpack.c.bf16 %v381, %v380
        %v390 = vld [vmem:[%s2] sm:$0xf]
        %v391 = vld [vmem:[%s2 + $0x4] sm:$0xf]
        %v392 = vld [vmem:[%s2 + $0x8] sm:$0xf]
        %v393 = vld [vmem:[%s2 + $0xc] sm:$0xf]
        %v394 = vld [vmem:[%s2 + $0x10] sm:$0xf]
        %v395 = vld [vmem:[%s2 + $0x14] sm:$0xf]
        %v396 = vld [vmem:[%s2 + $0x18] sm:$0xf]
        %v397 = vld [vmem:[%s2 + $0x1c] sm:$0xf]
        %v398 = vld [vmem:[%s2 + $0x20] sm:$0xf]
        %v399 = vld [vmem:[%s2 + $0x24] sm:$0xf]
        %v400 = vld [vmem:[%s2 + $0x28] sm:$0xf]
        %v401 = vld [vmem:[%s2 + $0x2c] sm:$0xf]
        %v402 = vld [vmem:[%s2 + $0x30] sm:$0xf]
        %v403 = vld [vmem:[%s2 + $0x34] sm:$0xf]
        %v404 = vld [vmem:[%s2 + $0x38] sm:$0xf]
        %v405 = vld [vmem:[%s2 + $0x3c] sm:$0xf]
        %v406 = vld [vmem:[%s3 + $0x1] sm:$0x1]
        %v407 = vlaneseq
        %v408 = vshrl.u32 %v407, 7
        %v409 = vsub.s32 0, %v408
        %v410 = vrot.slane %v406, %v409
        %v427 = vunpack.c.l.b16 %v390
        %v428 = vunpack.c.l.b16 %v391
        %v429 = vunpack.c.l.b16 %v392
        %v430 = vunpack.c.l.b16 %v393
        %v431 = vunpack.c.l.b16 %v394
        %v432 = vunpack.c.l.b16 %v395
        %v433 = vunpack.c.l.b16 %v396
        %v434 = vunpack.c.l.b16 %v397
        %v435 = vunpack.c.l.b16 %v398
        %v436 = vunpack.c.l.b16 %v399
        %v437 = vunpack.c.l.b16 %v400
        %v438 = vunpack.c.l.b16 %v401
        %v439 = vunpack.c.l.b16 %v402
        %v440 = vunpack.c.l.b16 %v403
        %v441 = vunpack.c.l.b16 %v404
        %v442 = vunpack.c.l.b16 %v405
        %v443 = vpack.c.b16 %v428, %v427
        %v444 = vpack.c.b16 %v430, %v429
        %v445 = vpack.c.b16 %v432, %v431
        %v446 = vpack.c.b16 %v434, %v433
        %v447 = vpack.c.b16 %v436, %v435
        %v448 = vpack.c.b16 %v438, %v437
        %v449 = vpack.c.b16 %v440, %v439
        %v450 = vpack.c.b16 %v442, %v441
        %459 = vmatprep.subr.bf16.mxu0 0
        %460 = vmatpush1.bf16.msra.mxu0 %v443
        %461 = vmatprep.subr.bf16.mxu0 0
        %462 = vmatpush1.bf16.msra.mxu0 %v444
        %463 = vmatprep.subr.bf16.mxu0 0
        %464 = vmatpush1.bf16.msra.mxu0 %v445
        %465 = vmatprep.subr.bf16.mxu0 0
        %466 = vmatpush1.bf16.msra.mxu0 %v446
        %467 = vmatprep.subr.bf16.mxu0 0
        %468 = vmatpush1.bf16.msra.mxu0 %v447
        %469 = vmatprep.subr.bf16.mxu0 0
        %470 = vmatpush1.bf16.msra.mxu0 %v448
        %471 = vmatprep.subr.bf16.mxu0 0
        %472 = vmatpush1.bf16.msra.mxu0 %v449
        %473 = vmatprep.subr.bf16.mxu0 0
        %474 = vmatpush1.bf16.msra.mxu0 %v450
        %475 = vmatprep.subr.bf16.mxu0 0
        %476 = vmatpush1.bf16.msra.mxu0 0
        %477 = vmatprep.subr.bf16.mxu0 0
        %478 = vmatpush1.bf16.msra.mxu0 0
        %479 = vmatprep.subr.bf16.mxu0 0
        %480 = vmatpush1.bf16.msra.mxu0 0
        %481 = vmatprep.subr.bf16.mxu0 0
        %482 = vmatpush1.bf16.msra.mxu0 0
        %483 = vmatprep.subr.bf16.mxu0 0
        %484 = vmatpush1.bf16.msra.mxu0 0
        %485 = vmatprep.subr.bf16.mxu0 0
        %486 = vmatpush1.bf16.msra.mxu0 0
        %487 = vmatprep.subr.bf16.mxu0 0
        %488 = vmatpush1.bf16.msra.mxu0 0
        %489 = vmatprep.subr.bf16.mxu0 0
        %490 = vmatpush1.bf16.msra.mxu0 0
        %491 = vmatprep.mubr.bf16.mxu0 0
        %492 = vmatmul.mubr.bf16.gmra.mrb[0].mxu0 %v382
        %v493 = vpop.f32.mrb[0].mxu0
        %v494 = vadd.f32 %v410, %v493
        %v495 = vpop.f32.mrb[0].mxu0
        %v496 = vpop.f32.mrb[0].mxu0
        %v497 = vadd.f32 %v410, %v496
        %v498 = vpop.f32.mrb[0].mxu0
        %499 = vmatprep.mubr.bf16.mxu0 0
        %500 = vmatmul.mubr.bf16.gmra.mrb[0].mxu0 %v383
        %v501 = vpop.f32.mrb[0].mxu0
        %v502 = vadd.f32 %v410, %v501
        %v503 = vpop.f32.mrb[0].mxu0
        %v504 = vpop.f32.mrb[0].mxu0
        %v505 = vadd.f32 %v410, %v504
        %v506 = vpop.f32.mrb[0].mxu0
        %507 = vmatprep.mubr.bf16.mxu0 0
        %508 = vmatmul.mubr.bf16.gmra.mrb[0].mxu0 %v384
        %v509 = vpop.f32.mrb[0].mxu0
        %v510 = vadd.f32 %v410, %v509
        %v511 = vpop.f32.mrb[0].mxu0
        %v512 = vpop.f32.mrb[0].mxu0
        %v513 = vadd.f32 %v410, %v512
        %v514 = vpop.f32.mrb[0].mxu0
        %515 = vmatprep.mubr.bf16.mxu0 0
        %516 = vmatmul.mubr.bf16.gmra.mrb[0].mxu0 %v385
        %v517 = vpop.f32.mrb[0].mxu0
        %v518 = vadd.f32 %v410, %v517
        %v519 = vpop.f32.mrb[0].mxu0
        %v520 = vpop.f32.mrb[0].mxu0
        %v521 = vadd.f32 %v410, %v520
        %v522 = vpop.f32.mrb[0].mxu0
        %523 = vmatprep.mubr.bf16.mxu0 0
        %524 = vmatmul.mubr.bf16.gmra.mrb[0].mxu0 %v386
        %v525 = vpop.f32.mrb[0].mxu0
        %v526 = vadd.f32 %v410, %v525
        %v527 = vpop.f32.mrb[0].mxu0
        %v528 = vpop.f32.mrb[0].mxu0
        %v529 = vadd.f32 %v410, %v528
        %v530 = vpop.f32.mrb[0].mxu0
        %531 = vmatprep.mubr.bf16.mxu0 0
        %532 = vmatmul.mubr.bf16.gmra.mrb[0].mxu0 %v387
        %v533 = vpop.f32.mrb[0].mxu0
        %v534 = vadd.f32 %v410, %v533
        %v535 = vpop.f32.mrb[0].mxu0
        %v536 = vpop.f32.mrb[0].mxu0
        %v537 = vadd.f32 %v410, %v536
        %v538 = vpop.f32.mrb[0].mxu0
        %539 = vmatprep.mubr.bf16.mxu0 0
        %540 = vmatmul.mubr.bf16.gmra.mrb[0].mxu0 %v388
        %v541 = vpop.f32.mrb[0].mxu0
        %v542 = vadd.f32 %v410, %v541
        %v543 = vpop.f32.mrb[0].mxu0
        %v544 = vpop.f32.mrb[0].mxu0
        %v545 = vadd.f32 %v410, %v544
        %v546 = vpop.f32.mrb[0].mxu0
        %547 = vmatprep.mubr.bf16.mxu0 0
        %548 = vmatmul.mubr.bf16.gmra.mrb[0].mxu0 %v389
        %v549 = vpop.f32.mrb[0].mxu0
        %v550 = vadd.f32 %v410, %v549
        %v551 = vpop.f32.mrb[0].mxu0
        %v552 = vpop.f32.mrb[0].mxu0
        %v553 = vadd.f32 %v410, %v552
        %v554 = vpop.f32.mrb[0].mxu0
        %555 = vdwg.mxu0
        %v556 = vmax.f32 %v494, 0.0
        %v557 = vmax.f32 %v497, 0.0
        %v558 = vmax.f32 %v502, 0.0
        %v559 = vmax.f32 %v505, 0.0
        %v560 = vmax.f32 %v510, 0.0
        %v561 = vmax.f32 %v513, 0.0
        %v562 = vmax.f32 %v518, 0.0
        %v563 = vmax.f32 %v521, 0.0
        %v564 = vmax.f32 %v526, 0.0
        %v565 = vmax.f32 %v529, 0.0
        %v566 = vmax.f32 %v534, 0.0
        %v567 = vmax.f32 %v537, 0.0
        %v568 = vmax.f32 %v542, 0.0
        %v569 = vmax.f32 %v545, 0.0
        %v570 = vmax.f32 %v550, 0.0
        %v571 = vmax.f32 %v553, 0.0
        %v572 = vmax.f32 %v556, %v557
        %v573 = vrot.slane %v572, 4
        %v574 = vmax.f32 %v572, %v573
        %v575 = vrot.slane %v574, 2
        %v576 = vmax.f32 %v574, %v575
        %v577 = vrot.slane %v576, 1
        %v578 = vmax.f32 %v576, %v577
        %v579 = vmax.f32 %v558, %v559
        %v580 = vrot.slane %v579, 4
        %v581 = vmax.f32 %v579, %v580
        %v582 = vrot.slane %v581, 2
        %v583 = vmax.f32 %v581, %v582
        %v584 = vrot.slane %v583, 1
        %v585 = vmax.f32 %v583, %v584
        %v586 = vmax.f32 %v560, %v561
        %v587 = vrot.slane %v586, 4
        %v588 = vmax.f32 %v586, %v587
        %v589 = vrot.slane %v588, 2
        %v590 = vmax.f32 %v588, %v589
        %v591 = vrot.slane %v590, 1
        %v592 = vmax.f32 %v590, %v591
        %v593 = vmax.f32 %v562, %v563
        %v594 = vrot.slane %v593, 4
        %v595 = vmax.f32 %v593, %v594
        %v596 = vrot.slane %v595, 2
        %v597 = vmax.f32 %v595, %v596
        %v598 = vrot.slane %v597, 1
        %v599 = vmax.f32 %v597, %v598
        %v600 = vmax.f32 %v564, %v565
        %v601 = vrot.slane %v600, 4
        %v602 = vmax.f32 %v600, %v601
        %v603 = vrot.slane %v602, 2
        %v604 = vmax.f32 %v602, %v603
        %v605 = vrot.slane %v604, 1
        %v606 = vmax.f32 %v604, %v605
        %v607 = vmax.f32 %v566, %v567
        %v608 = vrot.slane %v607, 4
        %v609 = vmax.f32 %v607, %v608
        %v610 = vrot.slane %v609, 2
        %v611 = vmax.f32 %v609, %v610
        %v612 = vrot.slane %v611, 1
        %v613 = vmax.f32 %v611, %v612
        %v614 = vmax.f32 %v568, %v569
        %v615 = vrot.slane %v614, 4
        %v616 = vmax.f32 %v614, %v615
        %v617 = vrot.slane %v616, 2
        %v618 = vmax.f32 %v616, %v617
        %v619 = vrot.slane %v618, 1
        %v620 = vmax.f32 %v618, %v619
        %v621 = vmax.f32 %v570, %v571
        %v622 = vrot.slane %v621, 4
        %v623 = vmax.f32 %v621, %v622
        %v624 = vrot.slane %v623, 2
        %v625 = vmax.f32 %v623, %v624
        %v626 = vrot.slane %v625, 1
        %v627 = vmax.f32 %v625, %v626
        %vm636 = vcmask 1041409
        %v637 = vsel %vm636, %v585, %v578
        %vm638 = vcmask 1042434
        %v639 = vsel %vm638, %v592, %v637
        %vm640 = vcmask 1043459
        %v641 = vsel %vm640, %v599, %v639
        %vm642 = vcmask 1044484
        %v643 = vsel %vm642, %v606, %v641
        %vm644 = vcmask 1045509
        %v645 = vsel %vm644, %v613, %v643
        %vm646 = vcmask 1046534
        %v647 = vsel %vm646, %v620, %v645
        %vm648 = vcmask 1047559
        %v649 = vsel %vm648, %v627, %v647
        %651 = vst [vmem:[%s191] sm:$0xff] %v649
        %s652 = sand.u32 %s115, 1
        %s653 = scalar_lea.sflag [#allocation3], %s652
        %s654 = sand.u32 %s115, 1
        %s655 = smul.addr %s654, 8
        %s656 = scalar_lea.vmem [#allocation2], %s655
        // Predicated region
        $region37: #{tpu_custom_call.1} parent=35 // pred_check
          %p657 = pneg %p125
        $region38: #{tpu_custom_call.1} parent=35 // pred_check_branch
          %659 = sbr.rel (%p657) target = $region40
        $region39: #{tpu_custom_call.1} parent=35 // pred_region
          %s661 = ssub.s32 128, 128
          %662 = vsyncadd %s653, %s661
          %s663 = smul.addr %s18, 128
          %s664 = scalar_lea.hbm %s4, %s663
          %s666 = sshll.u32 %s656, 4
          %s667 = int_to_ptr.vmem [resolvable:$true] %s666
          %669 = dma.vmem_to_hbm [thread:$0]  %s667, 128, %s664, %s653
        $region40: #{tpu_custom_call.1} parent=35 // pred_fallthru
          _
      $region36: #{tpu_custom_call.1} parent=5 // pred_fallthru
        _
      %p670 = scmp.le.s32.totalorder 2, %s13
      // Predicated region
      $region41: #{tpu_custom_call.1} parent=5 // pred_check
        %p671 = pneg %p670
      $region42: #{tpu_custom_call.1} parent=5 // pred_check_branch
        %673 = sbr.rel (%p671) target = $region44
      $region43: #{tpu_custom_call.1} parent=5 // pred_region
        %s674 = ssub.s32 %s13, 2
        // Predicated region
        $region45: #{tpu_custom_call.1} parent=43 // pred_check
          %p675 = pneg %p131
        $region46: #{tpu_custom_call.1} parent=43 // pred_check_branch
          %677 = sbr.rel (%p675) target = $region48
        $region47: #{tpu_custom_call.1} parent=43 // pred_region
          %s678 = sand.u32 %s116, 1
          %s679 = scalar_lea.sflag [#allocation3], %s678
          %s680 = sand.u32 %s116, 1
          %s681 = smul.addr %s680, 8
          %s682 = scalar_lea.vmem [#allocation2], %s681
          %683 = dma.done %s679, 128
        $region48: #{tpu_custom_call.1} parent=43 // pred_fallthru
          _
      $region44: #{tpu_custom_call.1} parent=5 // pred_fallthru
        _
    $region6: #{tpu_custom_call.1} parent=1 // loop_footer
      %s17 = sadd.s32 1, %s13
    $region7: #{tpu_custom_call.1} parent=1 // loop_footer_branch
      %12 = sbr.rel target = $region3
    $region8: #{tpu_custom_call.1} parent=1 // loop_exit
      _
    %684 = vsyncpa [#allocation3], 1
    %s685 = scalar_lea.sflag [#allocation3], 1
    %686 = vsyncpa %s685, 1

</llo_original>
